<compile_context>
chip_gen: v6e
topology: v6e:2x2x1
jax: 0.10.0
libtpu: 0.0.40
codegen_flags: <defaults>
</compile_context>

<pallas_src>
import math
import functools

import jax
import jax.numpy as jnp
from jax.experimental import pallas as pl
from jax.experimental.pallas import tpu as pltpu


def build_pe_table(max_seq_len: int, d_model: int) -> jnp.ndarray:
    """Positional-encoding buffer matching the PyTorch loops exactly:
       pe[pos, i]   = sin(pos / 10000 ** (2*i       / d_model))
       pe[pos, i+1] = cos(pos / 10000 ** (2*(i + 1) / d_model))   for even i.
    NOTE: the 2*(i+1) exponent for cos is a quirk of the reference module
    (canonical Vaswani PE would reuse 2*i); kept intentionally to match.
    """
    assert d_model % 2 == 0, "d_model must be even (the PyTorch loop writes sin/cos pairs)"
    pos = jnp.arange(max_seq_len, dtype=jnp.float32)[:, None]          # (L, 1)
    i_even = jnp.arange(0, d_model, 2, dtype=jnp.float32)[None, :]     # (1, D/2)
    sin_part = jnp.sin(pos / jnp.power(10000.0, 2.0 * i_even / d_model))
    cos_part = jnp.cos(pos / jnp.power(10000.0, 2.0 * (i_even + 1.0) / d_model))
    # Interleave: even columns = sin, odd columns = cos.
    pe = jnp.stack([sin_part, cos_part], axis=-1).reshape(max_seq_len, d_model)
    return pe.astype(jnp.float32)


# ---------------------------------------------------------------------------
# Kernels
# ---------------------------------------------------------------------------

def _pos_enc_kernel_batched(x_ref, pe_ref, o_ref, *, scale):
    # x/o: (B, ts, d_eff); pe: (ts, d_eff).  The broadcast add is free VALU
    # filler — this kernel is DMA-bound.
    o_ref[...] = x_ref[...] * scale + pe_ref[...][None, :, :]


def _pos_enc_kernel_flat(x_ref, pe_ref, o_ref, *, scale):
    # All refs are 2-D (ts, d_eff): pure lane-parallel VPU work.
    o_ref[...] = x_ref[...] * scale + pe_ref[...]


# ---------------------------------------------------------------------------
# Tiling plan
# ---------------------------------------------------------------------------

def _vmem_limit_bytes() -> int:
    """Scoped VMEM limit: 3/4 of physical capacity, capped at 64 MiB
    (-> 64 MiB on 128 MiB v5e/v6e, ~48 MiB on the 64 MiB-per-TC v7x)."""
    try:
        cap = int(pltpu.get_tpu_info().vmem_capacity_bytes)
    except Exception:  # pragma: no cover - conservative fallback
        cap = 64 << 20
    return int(min(cap * 3 // 4, 64 << 20))


def _plan_tiles(batch: int, s_eff: int, d_eff: int, itemsize: int, vmem_limit: int):
    """Decide (fold_batch, seq_tile_rows).

    fold_batch: whether the whole batch dim rides inside each block.
    seq_tile_rows: multiple of the dtype sublane (8/16/32) or the full seq dim.
    """
    sub = max(32 // itemsize, 8)          # 8 f32, 16 bf16, 32 int8/fp8
    budget = (vmem_limit * 5) // 6        # ~1.2x headroom over the live working set
    row = d_eff * itemsize

    # Live VMEM per seq-row, double-buffered: 2 * (x block + out block + pe block).
    per_row_folded = 2 * (2 * batch * row + row)
    fold_batch = per_row_folded * sub <= budget
    per_row = per_row_folded if fold_batch else 2 * (3 * row)

    ts = budget // per_row
    ts = max(sub, min(int(ts), 2048))     # >=512..1024 rows already hits ~85% of HBM roofline
    ts = (ts // sub) * sub

    if ts >= s_eff:
        if s_eff >= 2 * sub:
            # Split the single tile in two so v7x's 2 TensorCores both stream.
            half = (s_eff + 1) // 2
            ts = ((half + sub - 1) // sub) * sub
        else:
            ts = s_eff                    # single full block (full-dim exception)
    return fold_batch, ts


# ---------------------------------------------------------------------------
# Wrapper
# ---------------------------------------------------------------------------

def positional_encoder(x: jnp.ndarray, pe_full: jnp.ndarray, d_model: int,
                       *, donate_x: bool = False) -> jnp.ndarray:
    """x: (B, S, D); pe_full: (max_seq_len, D). Returns x*sqrt(D) + pe[:S]."""
    B, S, D = x.shape
    assert D == d_model
    assert S <= pe_full.shape[0], "seq_len exceeds max_seq_len of the PE table"
    scale = float(math.sqrt(d_model))
    itemsize = jnp.dtype(x.dtype).itemsize
    pe = pe_full[:S, :].astype(x.dtype)   # slice to current seq length (glue, plain JAX)

    # Lane-dense repack: fold k consecutive positions into the lane dim so the
    # last dim becomes a multiple of 128 (unmasked vst).  Exact: x and pe are
    # folded identically, so the elementwise add is unchanged.  Row-major
    # (S, D) -> (S/k, D*k) is a free layout-preserving reshape.
    k = 1
    if D % 128 != 0:
        kk = 128 // math.gcd(D, 128)
        if S % kk == 0:
            k = kk
    s_eff, d_eff = S // k, D * k
    x2 = x.reshape(B, s_eff, d_eff)
    pe2 = pe.reshape(s_eff, d_eff)

    vmem_limit = _vmem_limit_bytes()
    fold_batch, ts = _plan_tiles(B, s_eff, d_eff, itemsize, vmem_limit)
    # Ragged last block is fine WITHOUT padding: the op is elementwise, so
    # garbage OOB input rows only ever map to OOB output rows, which Pallas
    # masks on writeback.  (Invariant: do not reuse this for reductions.)
    num_tiles = -(-s_eff // ts)

    call_kwargs = {}
    if donate_x:
        # Output reuses x's HBM buffer (shapes/dtype match after the free fold).
        call_kwargs["input_output_aliases"] = {0: 0}

    if fold_batch:
        grid = (num_tiles,)
        in_specs = [
            pl.BlockSpec((B, ts, d_eff), lambda s: (0, s, 0)),   # x tile (whole batch)
            pl.BlockSpec((ts, d_eff), lambda s: (s, 0)),          # shared PE tile
        ]
        out_specs = pl.BlockSpec((B, ts, d_eff), lambda s: (0, s, 0))
        dims = ("parallel",)
        kernel = functools.partial(_pos_enc_kernel_batched, scale=scale)
    else:
        # Fallback for huge B * d_model: seq outer / batch inner so the PE tile
        # stays VMEM-resident across the batch loop; squeezed batch -> 2-D refs.
        grid = (num_tiles, B)
        in_specs = [
            pl.BlockSpec((pl.Squeezed(), ts, d_eff), lambda s, b: (b, s, 0)),
            pl.BlockSpec((ts, d_eff), lambda s, b: (s, 0)),
        ]
        out_specs = pl.BlockSpec((pl.Squeezed(), ts, d_eff), lambda s, b: (b, s, 0))
        dims = ("parallel", "parallel")
        kernel = functools.partial(_pos_enc_kernel_flat, scale=scale)

    out = pl.pallas_call(
        kernel,
        out_shape=jax.ShapeDtypeStruct((B, s_eff, d_eff), x.dtype),
        grid_spec=pltpu.PrefetchScalarGridSpec(
            num_scalar_prefetch=0,
            grid=grid,
            in_specs=in_specs,
            out_specs=out_specs,
        ),
        compiler_params=pltpu.CompilerParams(
            dimension_semantics=dims,
            vmem_limit_bytes=vmem_limit,
        ),
        cost_estimate=pl.CostEstimate(
            flops=2 * B * S * D,
            transcendentals=0,
            bytes_accessed=(2 * B * S * D + S * D) * itemsize,
        ),
        **call_kwargs,
    )(x2, pe2)

    return out.reshape(B, S, D)


if __name__ == "__main__":
    d_model = 32
    max_seq_len = 150

    key = jax.random.PRNGKey(0)
    pe_full = build_pe_table(max_seq_len, d_model)

    # Primary small-shape run (matches the module's typical usage).
    batch, seq_len = 2, 8
    x = jax.random.normal(key, (batch, seq_len, d_model), dtype=jnp.float32)
    out = jax.block_until_ready(positional_encoder(x, pe_full, d_model))
    ref = x * math.sqrt(d_model) + pe_full[None, :seq_len, :]
    assert jnp.allclose(out, ref, atol=1e-5, rtol=1e-5), "mismatch vs reference (small)"

    # Ragged-sequence check: exercises the no-pad path where the last seq tile
    # overruns the array and Pallas masks the out-of-bounds output rows.
    seq_len2 = max_seq_len  # 150: not a multiple of the tile size chosen above
    x2 = jax.random.normal(jax.random.PRNGKey(1), (batch, seq_len2, d_model),
                           dtype=jnp.float32)
    out2 = jax.block_until_ready(positional_encoder(x2, pe_full, d_model))
    ref2 = x2 * math.sqrt(d_model) + pe_full[None, :seq_len2, :]
    assert jnp.allclose(out2, ref2, atol=1e-5, rtol=1e-5), "mismatch vs reference (ragged)"

    print("KERNEL_OK")
</pallas_src>

<mosaic_0001>
module attributes {stable_mosaic.version = 11 : i64} {
  func.func @_pos_enc_kernel_batched(%arg0: i32, %arg1: memref<2x2x128xf32, #tpu.memory_space<vmem>>, %arg2: memref<2x128xf32, #tpu.memory_space<vmem>>, %arg3: memref<2x2x128xf32, #tpu.memory_space<vmem>>) attributes {dimension_semantics = [#tpu.dimension_semantics<parallel>], iteration_bounds = array<i64: 1>, scalar_prefetch = 0 : i64, scratch_operands = 0 : i64, tpu.core_type = #tpu.core_type<tc>, window_params = [{transform_indices = @transform_0, window_bounds = array<i64: 2, 2, 128>}, {transform_indices = @transform_1, window_bounds = array<i64: 2, 128>}, {transform_indices = @transform_2, window_bounds = array<i64: 2, 2, 128>}]} {
    %c0 = arith.constant 0 : index
    %c0_0 = arith.constant 0 : index
    %c0_1 = arith.constant 0 : index
    %0 = vector.load %arg1[%c0, %c0_0, %c0_1] : memref<2x2x128xf32, #tpu.memory_space<vmem>>, vector<2x2x128xf32>
    %cst = arith.constant 5.65685415 : f32
    %1 = vector.broadcast %cst : f32 to vector<2x2x128xf32>
    %2 = arith.mulf %0, %1 : vector<2x2x128xf32>
    %c0_2 = arith.constant 0 : index
    %c0_3 = arith.constant 0 : index
    %3 = vector.load %arg2[%c0_2, %c0_3] : memref<2x128xf32, #tpu.memory_space<vmem>>, vector<2x128xf32>
    %4 = vector.shape_cast %3 : vector<2x128xf32> to vector<1x2x128xf32>
    %5 = vector.broadcast %4 : vector<1x2x128xf32> to vector<2x2x128xf32>
    %6 = arith.addf %2, %5 : vector<2x2x128xf32>
    %c0_4 = arith.constant 0 : index
    %c0_5 = arith.constant 0 : index
    %c0_6 = arith.constant 0 : index
    %7 = vector.load %arg3[%c0_4, %c0_5, %c0_6] : memref<2x2x128xf32, #tpu.memory_space<vmem>>, vector<2x2x128xf32>
    tpu.vector_store %arg3[%c0_4, %c0_5, %c0_6], %6 {strides = array<i32>} : memref<2x2x128xf32, #tpu.memory_space<vmem>>, vector<2x2x128xf32>,
    return
  }
  func.func @transform_0(%arg0: i32) -> (i32, i32, i32) {
    %c0_i32 = arith.constant 0 : i32
    %c0_i32_0 = arith.constant 0 : i32
    %c0_i32_1 = arith.constant 0 : i32
    return %c0_i32, %arg0, %c0_i32_0 : i32, i32, i32
  }
  func.func @transform_1(%arg0: i32) -> (i32, i32) {
    %c0_i32 = arith.constant 0 : i32
    %c0_i32_0 = arith.constant 0 : i32
    return %arg0, %c0_i32 : i32, i32
  }
  func.func @transform_2(%arg0: i32) -> (i32, i32, i32) {
    %c0_i32 = arith.constant 0 : i32
    %c0_i32_0 = arith.constant 0 : i32
    %c0_i32_1 = arith.constant 0 : i32
    return %c0_i32, %arg0, %c0_i32_0 : i32, i32, i32
  }
}

</mosaic_0001>

<llo_original>
// kernel: tpu_custom_call.1
$region0: #{tpu_custom_call.1}
  #allocation0 [shape = 'u32[]', space=smem, size = 0x4, offset = 0x4, fixed_abs, tag = 'smem constant byte address 0x4 - core index']
  #allocation1 [shape = 'u32[144,128]{1,0:T(1,128)}', space=vmem, size = 0x12000, scoped, tag = 'internal scratch']
  %s0 = inlined_call_operand.hbm [shape: f32[2,2,128], index: 0, kind: input, shape index: {}]
  %s1 = inlined_call_operand.hbm [shape: f32[2,128], index: 1, kind: input, shape index: {}]
  %s2 = inlined_call_operand.hbm [shape: f32[2,2,128], index: 2, kind: output, shape index: {}]
  %s3 = sld [smem:[#allocation0]]
  $region26: #{tpu_custom_call.1} parent=0
    _
  %s5 = ssub.s32 1, %s3
  %s6 = scalar_select 0, %s5, %s3
  $region1: #{tpu_custom_call.1} parent=0
    #allocation2 [shape = 'u8[2048]{0}', space=vmem, size = 0x800, scoped, tag = 'input window, operand 0, single buffered']
    #allocation3 [shape = 's32[1]{0}', space=sflag, size = 0x4, scoped, tag = 'scoped memory for tpu_custom_call.1']
    #allocation4 [shape = 's32[1]{0}', space=sflag, size = 0x4, scoped, tag = 'scoped memory for tpu_custom_call.1']
    #allocation5 [shape = 'u8[1024]{0}', space=vmem, size = 0x400, scoped, tag = 'input window, operand 1, single buffered']
    #allocation6 [shape = 's32[1]{0}', space=sflag, size = 0x4, scoped, tag = 'scoped memory for tpu_custom_call.1']
    #allocation7 [shape = 'u8[2048]{0}', space=vmem, size = 0x800, scoped, tag = 'output window, operand 0, single buffered']
    %7 = vsyncpa [#allocation3], 0
    %8 = vsyncpa [#allocation6], 0
    %9 = vsyncpa [#allocation4], 0
    // Predicated region
    $region2: #{tpu_custom_call.1} parent=1 // pred_check
      _
    $region3: #{tpu_custom_call.1} parent=1 // pred_check_branch
      %11 = sbr.rel (0) target = $region5
    $region4: #{tpu_custom_call.1} parent=1 // pred_region
      %s13 = ssub.s32 64, 64
      %14 = vsyncadd [#allocation3], %s13
      %s15 = sshll.u32 [#allocation2], 4
      %s16 = int_to_ptr.vmem [resolvable:$true] %s15
      %21 = dma.hbm_to_vmem [thread:$0]  %s0, 64, %s16, [#allocation3], 32, 32, 2
    $region5: #{tpu_custom_call.1} parent=1 // pred_fallthru
      _
    // Predicated region
    $region6: #{tpu_custom_call.1} parent=1 // pred_check
      _
    $region7: #{tpu_custom_call.1} parent=1 // pred_check_branch
      %23 = sbr.rel (0) target = $region9
    $region8: #{tpu_custom_call.1} parent=1 // pred_region
      %s25 = ssub.s32 32, 32
      %26 = vsyncadd [#allocation6], %s25
      %s28 = sshll.u32 [#allocation5], 4
      %s29 = int_to_ptr.vmem [resolvable:$true] %s28
      %31 = dma.hbm_to_vmem [thread:$0]  %s1, 32, %s29, [#allocation6]
    $region9: #{tpu_custom_call.1} parent=1 // pred_fallthru
      _
    // Predicated region
    $region10: #{tpu_custom_call.1} parent=1 // pred_check
      _
    $region11: #{tpu_custom_call.1} parent=1 // pred_check_branch
      %33 = sbr.rel (0) target = $region13
    $region12: #{tpu_custom_call.1} parent=1 // pred_region
      %34 = dma.done [#allocation3], 64
    $region13: #{tpu_custom_call.1} parent=1 // pred_fallthru
      _
    // Predicated region
    $region14: #{tpu_custom_call.1} parent=1 // pred_check
      _
    $region15: #{tpu_custom_call.1} parent=1 // pred_check_branch
      %36 = sbr.rel (0) target = $region17
    $region16: #{tpu_custom_call.1} parent=1 // pred_region
      %37 = dma.done [#allocation6], 32
    $region17: #{tpu_custom_call.1} parent=1 // pred_fallthru
      _
    %v38 = vld [vmem:[#allocation2] sm:$0x3]
    %v39 = vld [vmem:[#allocation2 + $0x2] sm:$0x3]
    %v40 = vmul.f32 %v38, 5.656854
    %v41 = vmul.f32 %v39, 5.656854
    %v42 = vld [vmem:[#allocation5] sm:$0x3]
    %v43 = vadd.f32 %v40, %v42
    %v44 = vadd.f32 %v41, %v42
    %45 = vst [vmem:[#allocation7] sm:$0x3] %v43
    %46 = vst [vmem:[#allocation7 + $0x2] sm:$0x3] %v44
    // Predicated region
    $region18: #{tpu_custom_call.1} parent=1 // pred_check
      _
    $region19: #{tpu_custom_call.1} parent=1 // pred_check_branch
      %48 = sbr.rel (0) target = $region21
    $region20: #{tpu_custom_call.1} parent=1 // pred_region
      %s50 = ssub.s32 64, 64
      %51 = vsyncadd [#allocation4], %s50
      %s52 = sshll.u32 [#allocation7], 4
      %s53 = int_to_ptr.vmem [resolvable:$true] %s52
      %58 = dma.vmem_to_hbm [thread:$0]  %s53, 64, %s2, [#allocation4], 32, 32, 2
    $region21: #{tpu_custom_call.1} parent=1 // pred_fallthru
      _
    // Predicated region
    $region22: #{tpu_custom_call.1} parent=1 // pred_check
      _
    $region23: #{tpu_custom_call.1} parent=1 // pred_check_branch
      %60 = sbr.rel (0) target = $region25
    $region24: #{tpu_custom_call.1} parent=1 // pred_region
      %61 = dma.done [#allocation4], 64
    $region25: #{tpu_custom_call.1} parent=1 // pred_fallthru
      _
    %62 = vsyncpa [#allocation3], 1
    %63 = vsyncpa [#allocation6], 1
    %64 = vsyncpa [#allocation4], 1

</llo_original>
